<compile_context>
chip_gen: v5e
topology: v5e:2x2
jax: 0.10.0
libtpu: 0.0.40
codegen_flags: <defaults>
</compile_context>

<pallas_src>
import functools

import jax
import jax.numpy as jnp
import numpy as np
from jax import lax
from jax.experimental import pallas as pl
from jax.experimental.pallas import tpu as pltpu


def _attention_kernel(*refs, heads_per_block, dim_head, scale,
                      add_map, project_out, single_step, mm_dtype):
    """One (batch, head_block) grid step.

    Ref order (inputs..., outputs...):
      x_ref     : (1, n, dim)          mm_dtype
      wq_ref    : (dh_blk, dim)        mm_dtype   this block's q rows (PyTorch layout)
      wk_ref    : (dh_blk, dim)        mm_dtype   this block's k rows
      wv_ref    : (dh_blk, dim)        mm_dtype   this block's v rows
      [wout_ref]: (dh_blk, dim)        mm_dtype   this block's out-proj rows
      [map_ref] : (1, H_BLK, n, n)     float32
      o_ref     : (1, n, out_dim)      float32    (VMEM-resident across head axis)
    """
    idx = 0
    x_ref = refs[idx]; idx += 1
    wq_ref = refs[idx]; idx += 1
    wk_ref = refs[idx]; idx += 1
    wv_ref = refs[idx]; idx += 1
    wout_ref = None
    if project_out:
        wout_ref = refs[idx]; idx += 1
    map_ref = None
    if add_map:
        map_ref = refs[idx]; idx += 1
    o_ref = refs[idx]

    x = x_ref[0]                                             # (n, dim)

    # Head-block projections: contract the model dim of x with the model dim
    # (last axis) of the PyTorch-layout weight rows -> no transpose, wide N.
    dn = (((1,), (1,)), ((), ()))                            # contract last dims
    q_blk = lax.dot_general(x, wq_ref[...], dn,
                            preferred_element_type=jnp.float32) * scale
    k_blk = lax.dot_general(x, wk_ref[...], dn,
                            preferred_element_type=jnp.float32)
    v_blk = lax.dot_general(x, wv_ref[...], dn,
                            preferred_element_type=jnp.float32)

    head_outs = []
    for h in range(heads_per_block):                         # static unroll
        lo = h * dim_head
        q_h = q_blk[:, lo:lo + dim_head].astype(mm_dtype)
        k_h = k_blk[:, lo:lo + dim_head].astype(mm_dtype)
        v_h = v_blk[:, lo:lo + dim_head].astype(mm_dtype)

        # q @ k^T, then numerically-stable softmax kept in f32.
        dots = lax.dot_general(q_h, k_h, dn,
                               preferred_element_type=jnp.float32)   # (n, n)
        dots = dots - jnp.max(dots, axis=-1, keepdims=True)
        e = jnp.exp(dots)
        attn = e * pl.reciprocal(jnp.sum(e, axis=-1, keepdims=True), approx=True)

        if add_map:
            # Matches the module: elementwise multiply AFTER softmax, no renorm.
            attn = map_ref[0, h] * attn

        head_outs.append(jnp.dot(attn.astype(mm_dtype), v_h,
                                 preferred_element_type=jnp.float32))

    head_out = (head_outs[0] if heads_per_block == 1
                else jnp.concatenate(head_outs, axis=-1))    # (n, dh_blk) f32

    if project_out:
        # Output projection folded into the head reduction:
        #   out = sum_blk head_out_blk @ W_out[blk_rows, :]
        contrib = jnp.dot(head_out.astype(mm_dtype), wout_ref[...],
                          preferred_element_type=jnp.float32)        # (n, dim)
    else:
        contrib = head_out

    if single_step:
        o_ref[0] = contrib.astype(o_ref.dtype)
    else:
        @pl.when(pl.program_id(1) == 0)
        def _init():
            o_ref[...] = jnp.zeros_like(o_ref)

        o_ref[0] += contrib.astype(o_ref.dtype)


def _vmem_limit_bytes():
    """~3/4 of physical VMEM (capped), with a conservative fallback."""
    cap = None
    try:
        cap = getattr(pltpu.get_tpu_info(), "vmem_capacity_bytes", None)
    except Exception:
        cap = None
    if not cap:
        return 48 * 1024 * 1024
    return int(max(32 * 1024 * 1024, min(cap * 3 // 4, 100 * 1024 * 1024)))


def _pick_head_block(heads, dim_head, n, dim, out_dim, add_map, project_out,
                     budget):
    """Largest divisor of `heads` whose per-step VMEM footprint fits `budget`
    (keeping the weight row-block sublane dim 8-aligned)."""
    def estimate(h_blk):
        dh = dim_head * h_blk
        bb = 2  # double-buffered input tiles
        total = bb * (n * dim * 2 + 3 * dh * dim * 2)        # x + wq/wk/wv (bf16)
        if project_out:
            total += bb * dh * dim * 2                       # wout (bf16)
        if add_map:
            total += bb * h_blk * n * n * 4                  # map (f32)
        total += n * out_dim * 4                             # resident output block
        total += 5 * n * dh * 4 + 4 * n * n * 4              # in-kernel intermediates
        return total

    divisors = [d for d in range(1, heads + 1) if heads % d == 0]
    aligned = [d for d in divisors if (dim_head * d) % 8 == 0]
    cands = aligned if aligned else [heads]
    best = cands[0]
    for c in cands:
        if estimate(c) <= budget:
            best = max(best, c)
    return best


def attention_pallas(x, w_qkv, w_out=None, map_attn=None, *,
                     heads, dim_head, add_map, head_block=None,
                     matmul_dtype=jnp.bfloat16):
    """UCTNet Attention forward.

    x        : (b, n, dim)               float32
    w_qkv    : (3*heads*dim_head, dim)   == to_qkv.weight (native PyTorch layout)
    w_out    : (heads*dim_head, dim)     == to_out[0].weight.T (one-time transpose
               at parameter-conversion time), or None when project_out is False
    map_attn : (b, heads, n, n) float32, or None
    """
    b, n, dim = x.shape
    inner = heads * dim_head
    project_out = not (heads == 1 and dim_head == dim)
    out_dim = dim if project_out else inner
    scale = float(dim_head) ** -0.5
    add_map = bool(add_map) and (map_attn is not None)

    if w_qkv.shape != (3 * inner, dim):
        raise ValueError(f"w_qkv must be (3*heads*dim_head, dim), got {w_qkv.shape}")
    if project_out:
        if w_out is None:
            raise ValueError("w_out is required when project_out is True")
        if w_out.shape != (inner, dim):
            raise ValueError(f"w_out must be (heads*dim_head, dim), got {w_out.shape}")
    if add_map and map_attn.shape != (b, heads, n, n):
        raise ValueError(f"map_attn must be (b, heads, n, n), got {map_attn.shape}")

    vmem_limit = _vmem_limit_bytes()
    if head_block is None:
        head_block = _pick_head_block(heads, dim_head, n, dim, out_dim,
                                      add_map, project_out,
                                      budget=int(vmem_limit * 0.6))
    if heads % head_block != 0:
        raise ValueError("head_block must divide heads")
    num_hblocks = heads // head_block
    dh_blk = head_block * dim_head

    x_mm = x.astype(matmul_dtype)
    w_qkv_mm = w_qkv.astype(matmul_dtype)      # dtype cast only; no reshape/transpose

    # Per-head-block tiles are contiguous ROW blocks of the PyTorch-layout weight:
    #   q rows [hb*dh_blk : ...], k rows [inner + hb*dh_blk : ...], v rows [2*inner + ...]
    nb = num_hblocks
    operands = [x_mm, w_qkv_mm, w_qkv_mm, w_qkv_mm]
    in_specs = [
        pl.BlockSpec((1, n, dim), lambda bi, hb: (bi, 0, 0)),
        pl.BlockSpec((dh_blk, dim), lambda bi, hb: (hb, 0)),           # q rows
        pl.BlockSpec((dh_blk, dim), lambda bi, hb: (nb + hb, 0)),      # k rows
        pl.BlockSpec((dh_blk, dim), lambda bi, hb: (2 * nb + hb, 0)),  # v rows
    ]
    if project_out:
        operands.append(w_out.astype(matmul_dtype))
        in_specs.append(pl.BlockSpec((dh_blk, dim), lambda bi, hb: (hb, 0)))
    if add_map:
        operands.append(map_attn.astype(jnp.float32))   # stays f32 (VPU-only use)
        in_specs.append(pl.BlockSpec((1, head_block, n, n),
                                     lambda bi, hb: (bi, hb, 0, 0)))

    kernel = functools.partial(
        _attention_kernel,
        heads_per_block=head_block, dim_head=dim_head, scale=scale,
        add_map=add_map, project_out=project_out,
        single_step=(num_hblocks == 1), mm_dtype=matmul_dtype)

    return pl.pallas_call(
        kernel,
        out_shape=jax.ShapeDtypeStruct((b, n, out_dim), jnp.float32),
        grid_spec=pltpu.PrefetchScalarGridSpec(
            num_scalar_prefetch=0,
            grid=(b, num_hblocks),
            in_specs=in_specs,
            out_specs=pl.BlockSpec((1, n, out_dim), lambda bi, hb: (bi, 0, 0)),
        ),
        compiler_params=pltpu.CompilerParams(
            dimension_semantics=("parallel", "arbitrary"),
            vmem_limit_bytes=vmem_limit),
    )(*operands)


def attention_ref(x, w_qkv, w_out=None, map_attn=None, *,
                  heads, dim_head, add_map):
    """Plain-JAX f32 reference mirroring the PyTorch module (same weight layouts)."""
    b, n, dim = x.shape
    inner = heads * dim_head
    project_out = not (heads == 1 and dim_head == dim)
    scale = dim_head ** (-0.5)
    add_map = bool(add_map) and (map_attn is not None)

    qkv = x @ w_qkv.T                                        # nn.Linear(bias=False)
    q, k, v = jnp.split(qkv, 3, axis=-1)
    split = lambda t: t.reshape(b, n, heads, dim_head).transpose(0, 2, 1, 3)
    q, k, v = split(q), split(k), split(v)
    dots = jnp.einsum('bhnd,bhmd->bhnm', q, k) * scale
    attn = jax.nn.softmax(dots, axis=-1)
    if add_map:
        attn = map_attn * attn
    out = jnp.einsum('bhnm,bhmd->bhnd', attn, v)
    out = out.transpose(0, 2, 1, 3).reshape(b, n, inner)
    return out @ w_out if project_out else out


if __name__ == "__main__":
    key = jax.random.PRNGKey(0)
    k1, k2, k3, k4, k5, k6 = jax.random.split(key, 6)

    batch, seq, dim = 2, 8, 32
    heads, dim_head = 4, 16
    inner = heads * dim_head

    x = jax.random.normal(k1, (batch, seq, dim), dtype=jnp.float32)
    # Weights in the layouts documented above (to_qkv.weight; to_out[0].weight.T).
    w_qkv = jax.random.normal(k2, (3 * inner, dim), dtype=jnp.float32) * 0.05
    w_out = jax.random.normal(k3, (inner, dim), dtype=jnp.float32) * 0.05
    map_attn = jax.random.uniform(k4, (batch, heads, seq, seq), dtype=jnp.float32)
    # NOTE: nn.Dropout(p=0.0) is a no-op -> intentionally not implemented.

    def check(out, ref):
        np.testing.assert_allclose(np.asarray(out), np.asarray(ref),
                                   rtol=5e-2, atol=5e-3)

    # Config A: multi-head, project_out=True, with attention map.
    # Auto head-block -> all heads fused into a single step per batch element.
    out = jax.block_until_ready(
        attention_pallas(x, w_qkv, w_out, map_attn,
                         heads=heads, dim_head=dim_head, add_map=True))
    check(out, attention_ref(x, w_qkv, w_out, map_attn,
                             heads=heads, dim_head=dim_head, add_map=True))

    # Config B: add_map=False -> map_attn is never DMA'd into the kernel.
    out_b = jax.block_until_ready(
        attention_pallas(x, w_qkv, w_out, None,
                         heads=heads, dim_head=dim_head, add_map=False))
    check(out_b, attention_ref(x, w_qkv, w_out, None,
                               heads=heads, dim_head=dim_head, add_map=False))

    # Config C: heads=1, dim_head=dim -> project_out=False (Identity); no w_out DMA.
    heads_c, dim_head_c = 1, dim
    w_qkv_c = jax.random.normal(k5, (3 * heads_c * dim_head_c, dim),
                                dtype=jnp.float32) * 0.05
    map_c = jax.random.uniform(k6, (batch, heads_c, seq, seq), dtype=jnp.float32)
    out_c = jax.block_until_ready(
        attention_pallas(x, w_qkv_c, None, map_c,
                         heads=heads_c, dim_head=dim_head_c, add_map=True))
    check(out_c, attention_ref(x, w_qkv_c, None, map_c,
                               heads=heads_c, dim_head=dim_head_c, add_map=True))

    # Config D: force head_block=2 -> exercises the multi-step head-reduction
    # path that accumulates directly into the VMEM-resident output block.
    out_d = jax.block_until_ready(
        attention_pallas(x, w_qkv, w_out, map_attn,
                         heads=heads, dim_head=dim_head, add_map=True,
                         head_block=2))
    check(out_d, attention_ref(x, w_qkv, w_out, map_attn,
                               heads=heads, dim_head=dim_head, add_map=True))

    print("KERNEL_OK")
</pallas_src>

<mosaic_0001>
module attributes {stable_mosaic.version = 11 : i64} {
  func.func @_attention_kernel(%arg0: i32, %arg1: i32, %arg2: memref<1x8x32xbf16, #tpu.memory_space<vmem>>, %arg3: memref<64x32xbf16, #tpu.memory_space<vmem>>, %arg4: memref<64x32xbf16, #tpu.memory_space<vmem>>, %arg5: memref<64x32xbf16, #tpu.memory_space<vmem>>, %arg6: memref<64x32xbf16, #tpu.memory_space<vmem>>, %arg7: memref<1x4x8x8xf32, #tpu.memory_space<vmem>>, %arg8: memref<1x8x32xf32, #tpu.memory_space<vmem>>) attributes {dimension_semantics = [#tpu.dimension_semantics<parallel>, #tpu.dimension_semantics<arbitrary>], iteration_bounds = array<i64: 2, 1>, scalar_prefetch = 0 : i64, scratch_operands = 0 : i64, tpu.core_type = #tpu.core_type<tc>, window_params = [{transform_indices = @transform_0, window_bounds = array<i64: 1, 8, 32>}, {transform_indices = @transform_1, window_bounds = array<i64: 64, 32>}, {transform_indices = @transform_2, window_bounds = array<i64: 64, 32>}, {transform_indices = @transform_3, window_bounds = array<i64: 64, 32>}, {transform_indices = @transform_4, window_bounds = array<i64: 64, 32>}, {transform_indices = @transform_5, window_bounds = array<i64: 1, 4, 8, 8>}, {transform_indices = @transform_6, window_bounds = array<i64: 1, 8, 32>}]} {
    %c0 = arith.constant 0 : index
    %c0_0 = arith.constant 0 : index
    %c0_1 = arith.constant 0 : index
    %0 = vector.load %arg2[%c0, %c0_0, %c0_1] : memref<1x8x32xbf16, #tpu.memory_space<vmem>>, vector<1x8x32xbf16>
    %1 = vector.shape_cast %0 : vector<1x8x32xbf16> to vector<8x32xbf16>
    %c0_2 = arith.constant 0 : index
    %c0_3 = arith.constant 0 : index
    %2 = vector.load %arg3[%c0_2, %c0_3] : memref<64x32xbf16, #tpu.memory_space<vmem>>, vector<64x32xbf16>
    %cst = arith.constant dense<0.000000e+00> : vector<8x64xf32>
    %3 = tpu.matmul %1, %2, %cst {dimension_numbers = #tpu.dot_dimension_numbers<[1], [1], [0], [0], [0, 0, 1, 0], [], []>} : vector<8x32xbf16>, vector<64x32xbf16>, vector<8x64xf32> -> vector<8x64xf32>
    %cst_4 = arith.constant 2.500000e-01 : f32
    %4 = vector.broadcast %cst_4 : f32 to vector<8x64xf32>
    %5 = arith.mulf %3, %4 : vector<8x64xf32>
    %c0_5 = arith.constant 0 : index
    %c0_6 = arith.constant 0 : index
    %6 = vector.load %arg4[%c0_5, %c0_6] : memref<64x32xbf16, #tpu.memory_space<vmem>>, vector<64x32xbf16>
    %cst_7 = arith.constant dense<0.000000e+00> : vector<8x64xf32>
    %7 = tpu.matmul %1, %6, %cst_7 {dimension_numbers = #tpu.dot_dimension_numbers<[1], [1], [0], [0], [0, 0, 1, 0], [], []>} : vector<8x32xbf16>, vector<64x32xbf16>, vector<8x64xf32> -> vector<8x64xf32>
    %c0_8 = arith.constant 0 : index
    %c0_9 = arith.constant 0 : index
    %8 = vector.load %arg5[%c0_8, %c0_9] : memref<64x32xbf16, #tpu.memory_space<vmem>>, vector<64x32xbf16>
    %cst_10 = arith.constant dense<0.000000e+00> : vector<8x64xf32>
    %9 = tpu.matmul %1, %8, %cst_10 {dimension_numbers = #tpu.dot_dimension_numbers<[1], [1], [0], [0], [0, 0, 1, 0], [], []>} : vector<8x32xbf16>, vector<64x32xbf16>, vector<8x64xf32> -> vector<8x64xf32>
    %10 = vector.extract_strided_slice %5 {offsets = [0, 0], sizes = [8, 16], strides = [1, 1]} : vector<8x64xf32> to vector<8x16xf32>
    %11 = arith.truncf %10 : vector<8x16xf32> to vector<8x16xbf16>
    %12 = vector.extract_strided_slice %7 {offsets = [0, 0], sizes = [8, 16], strides = [1, 1]} : vector<8x64xf32> to vector<8x16xf32>
    %13 = arith.truncf %12 : vector<8x16xf32> to vector<8x16xbf16>
    %14 = vector.extract_strided_slice %9 {offsets = [0, 0], sizes = [8, 16], strides = [1, 1]} : vector<8x64xf32> to vector<8x16xf32>
    %15 = arith.truncf %14 : vector<8x16xf32> to vector<8x16xbf16>
    %cst_11 = arith.constant dense<0.000000e+00> : vector<8x8xf32>
    %16 = tpu.matmul %11, %13, %cst_11 {dimension_numbers = #tpu.dot_dimension_numbers<[1], [1], [0], [0], [0, 0, 1, 0], [], []>} : vector<8x16xbf16>, vector<8x16xbf16>, vector<8x8xf32> -> vector<8x8xf32>
    %cst_12 = arith.constant dense<0xFF800000> : vector<8xf32>
    %17 = vector.multi_reduction <maximumf>, %16, %cst_12 [1] : vector<8x8xf32> to vector<8xf32>
    %18 = vector.shape_cast %17 : vector<8xf32> to vector<8x1xf32>
    %19 = vector.broadcast %18 : vector<8x1xf32> to vector<8x8xf32>
    %20 = arith.subf %16, %19 : vector<8x8xf32>
    %21 = math.exp %20 : vector<8x8xf32>
    %cst_13 = arith.constant dense<0.000000e+00> : vector<8xf32>
    %22 = vector.multi_reduction <add>, %21, %cst_13 [1] : vector<8x8xf32> to vector<8xf32>
    %23 = vector.shape_cast %22 : vector<8xf32> to vector<8x1xf32>
    %24 = tpu.reciprocal %23 {approx = true} : vector<8x1xf32> -> vector<8x1xf32>
    %25 = vector.broadcast %24 : vector<8x1xf32> to vector<8x8xf32>
    %26 = arith.mulf %21, %25 : vector<8x8xf32>
    %c0_14 = arith.constant 0 : index
    %c0_15 = arith.constant 0 : index
    %c0_16 = arith.constant 0 : index
    %c0_17 = arith.constant 0 : index
    %27 = vector.load %arg7[%c0_14, %c0_15, %c0_16, %c0_17] : memref<1x4x8x8xf32, #tpu.memory_space<vmem>>, vector<1x1x8x8xf32>
    %28 = vector.shape_cast %27 : vector<1x1x8x8xf32> to vector<8x8xf32>
    %29 = arith.mulf %28, %26 : vector<8x8xf32>
    %30 = arith.truncf %29 : vector<8x8xf32> to vector<8x8xbf16>
    %cst_18 = arith.constant dense<0.000000e+00> : vector<8x16xf32>
    %31 = tpu.matmul %30, %15, %cst_18 {dimension_numbers = #tpu.dot_dimension_numbers<[1], [0], [0], [1], [0, 0, 1, 1], [], []>} : vector<8x8xbf16>, vector<8x16xbf16>, vector<8x16xf32> -> vector<8x16xf32>
    %32 = vector.extract_strided_slice %5 {offsets = [0, 16], sizes = [8, 16], strides = [1, 1]} : vector<8x64xf32> to vector<8x16xf32>
    %33 = arith.truncf %32 : vector<8x16xf32> to vector<8x16xbf16>
    %34 = vector.extract_strided_slice %7 {offsets = [0, 16], sizes = [8, 16], strides = [1, 1]} : vector<8x64xf32> to vector<8x16xf32>
    %35 = arith.truncf %34 : vector<8x16xf32> to vector<8x16xbf16>
    %36 = vector.extract_strided_slice %9 {offsets = [0, 16], sizes = [8, 16], strides = [1, 1]} : vector<8x64xf32> to vector<8x16xf32>
    %37 = arith.truncf %36 : vector<8x16xf32> to vector<8x16xbf16>
    %cst_19 = arith.constant dense<0.000000e+00> : vector<8x8xf32>
    %38 = tpu.matmul %33, %35, %cst_19 {dimension_numbers = #tpu.dot_dimension_numbers<[1], [1], [0], [0], [0, 0, 1, 0], [], []>} : vector<8x16xbf16>, vector<8x16xbf16>, vector<8x8xf32> -> vector<8x8xf32>
    %cst_20 = arith.constant dense<0xFF800000> : vector<8xf32>
    %39 = vector.multi_reduction <maximumf>, %38, %cst_20 [1] : vector<8x8xf32> to vector<8xf32>
    %40 = vector.shape_cast %39 : vector<8xf32> to vector<8x1xf32>
    %41 = vector.broadcast %40 : vector<8x1xf32> to vector<8x8xf32>
    %42 = arith.subf %38, %41 : vector<8x8xf32>
    %43 = math.exp %42 : vector<8x8xf32>
    %cst_21 = arith.constant dense<0.000000e+00> : vector<8xf32>
    %44 = vector.multi_reduction <add>, %43, %cst_21 [1] : vector<8x8xf32> to vector<8xf32>
    %45 = vector.shape_cast %44 : vector<8xf32> to vector<8x1xf32>
    %46 = tpu.reciprocal %45 {approx = true} : vector<8x1xf32> -> vector<8x1xf32>
    %47 = vector.broadcast %46 : vector<8x1xf32> to vector<8x8xf32>
    %48 = arith.mulf %43, %47 : vector<8x8xf32>
    %c0_22 = arith.constant 0 : index
    %c1 = arith.constant 1 : index
    %c0_23 = arith.constant 0 : index
    %c0_24 = arith.constant 0 : index
    %49 = vector.load %arg7[%c0_22, %c1, %c0_23, %c0_24] : memref<1x4x8x8xf32, #tpu.memory_space<vmem>>, vector<1x1x8x8xf32>
    %50 = vector.shape_cast %49 : vector<1x1x8x8xf32> to vector<8x8xf32>
    %51 = arith.mulf %50, %48 : vector<8x8xf32>
    %52 = arith.truncf %51 : vector<8x8xf32> to vector<8x8xbf16>
    %cst_25 = arith.constant dense<0.000000e+00> : vector<8x16xf32>
    %53 = tpu.matmul %52, %37, %cst_25 {dimension_numbers = #tpu.dot_dimension_numbers<[1], [0], [0], [1], [0, 0, 1, 1], [], []>} : vector<8x8xbf16>, vector<8x16xbf16>, vector<8x16xf32> -> vector<8x16xf32>
    %54 = vector.extract_strided_slice %5 {offsets = [0, 32], sizes = [8, 16], strides = [1, 1]} : vector<8x64xf32> to vector<8x16xf32>
    %55 = arith.truncf %54 : vector<8x16xf32> to vector<8x16xbf16>
    %56 = vector.extract_strided_slice %7 {offsets = [0, 32], sizes = [8, 16], strides = [1, 1]} : vector<8x64xf32> to vector<8x16xf32>
    %57 = arith.truncf %56 : vector<8x16xf32> to vector<8x16xbf16>
    %58 = vector.extract_strided_slice %9 {offsets = [0, 32], sizes = [8, 16], strides = [1, 1]} : vector<8x64xf32> to vector<8x16xf32>
    %59 = arith.truncf %58 : vector<8x16xf32> to vector<8x16xbf16>
    %cst_26 = arith.constant dense<0.000000e+00> : vector<8x8xf32>
    %60 = tpu.matmul %55, %57, %cst_26 {dimension_numbers = #tpu.dot_dimension_numbers<[1], [1], [0], [0], [0, 0, 1, 0], [], []>} : vector<8x16xbf16>, vector<8x16xbf16>, vector<8x8xf32> -> vector<8x8xf32>
    %cst_27 = arith.constant dense<0xFF800000> : vector<8xf32>
    %61 = vector.multi_reduction <maximumf>, %60, %cst_27 [1] : vector<8x8xf32> to vector<8xf32>
    %62 = vector.shape_cast %61 : vector<8xf32> to vector<8x1xf32>
    %63 = vector.broadcast %62 : vector<8x1xf32> to vector<8x8xf32>
    %64 = arith.subf %60, %63 : vector<8x8xf32>
    %65 = math.exp %64 : vector<8x8xf32>
    %cst_28 = arith.constant dense<0.000000e+00> : vector<8xf32>
    %66 = vector.multi_reduction <add>, %65, %cst_28 [1] : vector<8x8xf32> to vector<8xf32>
    %67 = vector.shape_cast %66 : vector<8xf32> to vector<8x1xf32>
    %68 = tpu.reciprocal %67 {approx = true} : vector<8x1xf32> -> vector<8x1xf32>
    %69 = vector.broadcast %68 : vector<8x1xf32> to vector<8x8xf32>
    %70 = arith.mulf %65, %69 : vector<8x8xf32>
    %c0_29 = arith.constant 0 : index
    %c2 = arith.constant 2 : index
    %c0_30 = arith.constant 0 : index
    %c0_31 = arith.constant 0 : index
    %71 = vector.load %arg7[%c0_29, %c2, %c0_30, %c0_31] : memref<1x4x8x8xf32, #tpu.memory_space<vmem>>, vector<1x1x8x8xf32>
    %72 = vector.shape_cast %71 : vector<1x1x8x8xf32> to vector<8x8xf32>
    %73 = arith.mulf %72, %70 : vector<8x8xf32>
    %74 = arith.truncf %73 : vector<8x8xf32> to vector<8x8xbf16>
    %cst_32 = arith.constant dense<0.000000e+00> : vector<8x16xf32>
    %75 = tpu.matmul %74, %59, %cst_32 {dimension_numbers = #tpu.dot_dimension_numbers<[1], [0], [0], [1], [0, 0, 1, 1], [], []>} : vector<8x8xbf16>, vector<8x16xbf16>, vector<8x16xf32> -> vector<8x16xf32>
    %76 = vector.extract_strided_slice %5 {offsets = [0, 48], sizes = [8, 16], strides = [1, 1]} : vector<8x64xf32> to vector<8x16xf32>
    %77 = arith.truncf %76 : vector<8x16xf32> to vector<8x16xbf16>
    %78 = vector.extract_strided_slice %7 {offsets = [0, 48], sizes = [8, 16], strides = [1, 1]} : vector<8x64xf32> to vector<8x16xf32>
    %79 = arith.truncf %78 : vector<8x16xf32> to vector<8x16xbf16>
    %80 = vector.extract_strided_slice %9 {offsets = [0, 48], sizes = [8, 16], strides = [1, 1]} : vector<8x64xf32> to vector<8x16xf32>
    %81 = arith.truncf %80 : vector<8x16xf32> to vector<8x16xbf16>
    %cst_33 = arith.constant dense<0.000000e+00> : vector<8x8xf32>
    %82 = tpu.matmul %77, %79, %cst_33 {dimension_numbers = #tpu.dot_dimension_numbers<[1], [1], [0], [0], [0, 0, 1, 0], [], []>} : vector<8x16xbf16>, vector<8x16xbf16>, vector<8x8xf32> -> vector<8x8xf32>
    %cst_34 = arith.constant dense<0xFF800000> : vector<8xf32>
    %83 = vector.multi_reduction <maximumf>, %82, %cst_34 [1] : vector<8x8xf32> to vector<8xf32>
    %84 = vector.shape_cast %83 : vector<8xf32> to vector<8x1xf32>
    %85 = vector.broadcast %84 : vector<8x1xf32> to vector<8x8xf32>
    %86 = arith.subf %82, %85 : vector<8x8xf32>
    %87 = math.exp %86 : vector<8x8xf32>
    %cst_35 = arith.constant dense<0.000000e+00> : vector<8xf32>
    %88 = vector.multi_reduction <add>, %87, %cst_35 [1] : vector<8x8xf32> to vector<8xf32>
    %89 = vector.shape_cast %88 : vector<8xf32> to vector<8x1xf32>
    %90 = tpu.reciprocal %89 {approx = true} : vector<8x1xf32> -> vector<8x1xf32>
    %91 = vector.broadcast %90 : vector<8x1xf32> to vector<8x8xf32>
    %92 = arith.mulf %87, %91 : vector<8x8xf32>
    %c0_36 = arith.constant 0 : index
    %c3 = arith.constant 3 : index
    %c0_37 = arith.constant 0 : index
    %c0_38 = arith.constant 0 : index
    %93 = vector.load %arg7[%c0_36, %c3, %c0_37, %c0_38] : memref<1x4x8x8xf32, #tpu.memory_space<vmem>>, vector<1x1x8x8xf32>
    %94 = vector.shape_cast %93 : vector<1x1x8x8xf32> to vector<8x8xf32>
    %95 = arith.mulf %94, %92 : vector<8x8xf32>
    %96 = arith.truncf %95 : vector<8x8xf32> to vector<8x8xbf16>
    %cst_39 = arith.constant dense<0.000000e+00> : vector<8x16xf32>
    %97 = tpu.matmul %96, %81, %cst_39 {dimension_numbers = #tpu.dot_dimension_numbers<[1], [0], [0], [1], [0, 0, 1, 1], [], []>} : vector<8x8xbf16>, vector<8x16xbf16>, vector<8x16xf32> -> vector<8x16xf32>
    %98 = tpu.concatenate %31, %53, %75, %97 in 1 : vector<8x16xf32>, vector<8x16xf32>, vector<8x16xf32>, vector<8x16xf32> -> vector<8x64xf32>
    %99 = arith.truncf %98 : vector<8x64xf32> to vector<8x64xbf16>
    %c0_40 = arith.constant 0 : index
    %c0_41 = arith.constant 0 : index
    %100 = vector.load %arg6[%c0_40, %c0_41] : memref<64x32xbf16, #tpu.memory_space<vmem>>, vector<64x32xbf16>
    %cst_42 = arith.constant dense<0.000000e+00> : vector<8x32xf32>
    %101 = tpu.matmul %99, %100, %cst_42 {dimension_numbers = #tpu.dot_dimension_numbers<[1], [0], [0], [1], [0, 0, 1, 1], [], []>} : vector<8x64xbf16>, vector<64x32xbf16>, vector<8x32xf32> -> vector<8x32xf32>
    %c0_43 = arith.constant 0 : index
    %c0_44 = arith.constant 0 : index
    %c0_45 = arith.constant 0 : index
    %102 = vector.load %arg8[%c0_43, %c0_44, %c0_45] : memref<1x8x32xf32, #tpu.memory_space<vmem>>, vector<1x8x32xf32>
    %103 = vector.shape_cast %102 : vector<1x8x32xf32> to vector<8x32xf32>
    %104 = vector.shape_cast %101 : vector<8x32xf32> to vector<1x8x32xf32>
    tpu.vector_store %arg8[%c0_43, %c0_44, %c0_45], %104 {strides = array<i32>} : memref<1x8x32xf32, #tpu.memory_space<vmem>>, vector<1x8x32xf32>,
    return
  }
  func.func @transform_0(%arg0: i32, %arg1: i32) -> (i32, i32, i32) {
    %c0_i32 = arith.constant 0 : i32
    %c0_i32_0 = arith.constant 0 : i32
    %c0_i32_1 = arith.constant 0 : i32
    return %arg0, %c0_i32, %c0_i32_0 : i32, i32, i32
  }
  func.func @transform_1(%arg0: i32, %arg1: i32) -> (i32, i32) {
    %c0_i32 = arith.constant 0 : i32
    %c0_i32_0 = arith.constant 0 : i32
    return %arg1, %c0_i32 : i32, i32
  }
  func.func @transform_2(%arg0: i32, %arg1: i32) -> (i32, i32) {
    %c1_i32 = arith.constant 1 : i32
    %0 = arith.addi %c1_i32, %arg1 : i32
    %c0_i32 = arith.constant 0 : i32
    %c0_i32_0 = arith.constant 0 : i32
    return %0, %c0_i32 : i32, i32
  }
  func.func @transform_3(%arg0: i32, %arg1: i32) -> (i32, i32) {
    %c2_i32 = arith.constant 2 : i32
    %0 = arith.addi %c2_i32, %arg1 : i32
    %c0_i32 = arith.constant 0 : i32
    %c0_i32_0 = arith.constant 0 : i32
    return %0, %c0_i32 : i32, i32
  }
  func.func @transform_4(%arg0: i32, %arg1: i32) -> (i32, i32) {
    %c0_i32 = arith.constant 0 : i32
    %c0_i32_0 = arith.constant 0 : i32
    return %arg1, %c0_i32 : i32, i32
  }
  func.func @transform_5(%arg0: i32, %arg1: i32) -> (i32, i32, i32, i32) {
    %c0_i32 = arith.constant 0 : i32
    %c0_i32_0 = arith.constant 0 : i32
    %c0_i32_1 = arith.constant 0 : i32
    return %arg0, %arg1, %c0_i32, %c0_i32_0 : i32, i32, i32, i32
  }
  func.func @transform_6(%arg0: i32, %arg1: i32) -> (i32, i32, i32) {
    %c0_i32 = arith.constant 0 : i32
    %c0_i32_0 = arith.constant 0 : i32
    %c0_i32_1 = arith.constant 0 : i32
    return %arg0, %c0_i32, %c0_i32_0 : i32, i32, i32
  }
}

</mosaic_0001>

<llo_original>
// kernel: tpu_custom_call.1
$region0: #{tpu_custom_call.1}
  #allocation0 [shape = 'u32[]', space=smem, size = 0x4, offset = 0x4, fixed_abs, tag = 'smem constant byte address 0x4 - core index']
  #allocation1 [shape = 'u32[72,128]{1,0:T(1,128)}', space=vmem, size = 0x9000, scoped, tag = 'internal scratch']
  %s0 = inlined_call_operand.vmem [shape: bf16[2,8,32], index: 0, kind: input, shape index: {}]
  %s1 = inlined_call_operand.vmem [shape: bf16[192,32], index: 1, kind: input, shape index: {}]
  %s2 = inlined_call_operand.vmem [shape: bf16[192,32], index: 2, kind: input, shape index: {}]
  %s3 = inlined_call_operand.vmem [shape: bf16[192,32], index: 3, kind: input, shape index: {}]
  %s4 = inlined_call_operand.vmem [shape: bf16[64,32], index: 4, kind: input, shape index: {}]
  %s5 = inlined_call_operand.vmem [shape: f32[2,4,8,8], index: 5, kind: input, shape index: {}]
  %s6 = inlined_call_operand.hbm [shape: f32[2,8,32], index: 6, kind: output, shape index: {}]
  %s7 = sld [smem:[#allocation0]]
  $region57: #{tpu_custom_call.1} parent=0
    _
  %s9 = ssub.s32 1, %s7
  %s10 = scalar_select 0, %s9, %s7
  $region1: #{tpu_custom_call.1} parent=0
    #allocation2 [shape = 'u8[8192]{0}', space=vmem, size = 0x2000, scoped, tag = 'output window, operand 0']
    #allocation3 [shape = 's32[2]{0}', space=sflag, size = 0x8, scoped, tag = 'scoped memory for tpu_custom_call.1']
    %11 = vsyncpa [#allocation3], 0
    %s12 = scalar_lea.sflag [#allocation3], 1
    %13 = vsyncpa %s12, 0
    loop: start=0, step=1, limit=4
    $region2: #{tpu_custom_call.1} parent=1 // loop_pre_header
      _
    $region3: #{tpu_custom_call.1} parent=1 // loop_header
      %s15 = sphi 0, %s19
      %p16 = scmp.ge.s32.totalorder %s15, 4
      %s22 = sphi 0, %s34
      %s23 = sphi 0, %s30
      %s24 = sphi 0, %s22
      %s25 = sphi 0, %s23
      %s26 = sphi 0, %s24
      %s27 = sphi 0, %s25
      %s37 = sphi 0, %s39
      %s40 = sphi 0, %s37
      %s41 = sphi 0, %s40
      %s57 = sphi 0, %s41
      %s63 = sphi 0, %s65
      %s66 = sphi 0, %s63
      %s67 = sphi 0, %s66
      %s83 = sphi 0, %s67
      %s91 = sphi 0, %s93
      %s94 = sphi 0, %s91
      %s95 = sphi 0, %s94
      %s111 = sphi 0, %s95
      %s119 = sphi 0, %s121
      %s122 = sphi 0, %s119
      %s123 = sphi 0, %s122
      %s139 = sphi 0, %s123
      %s145 = sphi 0, %s147
      %s148 = sphi 0, %s145
      %s149 = sphi 0, %s148
      %s165 = sphi 0, %s149
      %s173 = sphi 0, %s175
      %s176 = sphi 0, %s173
      %s177 = sphi 0, %s176
      %s193 = sphi 0, %s177
      %s199 = sphi 0, %s201
      %s202 = sphi 0, %s199
      %s203 = sphi 0, %s202
      %s219 = sphi 0, %s203
    $region4: #{tpu_custom_call.1} parent=1 // loop_header_branch
      %18 = sbr.rel (%p16) target = $region8
    $region5: #{tpu_custom_call.1} parent=1 // loop_body
      %s20 = ssub.s32 %s15, 1
      %s21 = ssub.s32 %s15, 2
      %s28 = sadd.s32 1, %s23
      %p29 = scmp.ge.s32.totalorder %s28, 1
      %s30 = scalar_select %p29, 0, %s28
      %s31 = sadd.s32 1, %s22
      %s32 = scalar_select %p29, %s31, %s22
      %p33 = scmp.ge.s32.totalorder %s32, 2
      %s34 = scalar_select %p33, 0, %s32
      %s35 = ssub.s32 %s22, %s34
      %p36 = scmp.eq.s32.totalorder %s35, 0
      %s38 = sadd.s32 %s37, 1
      %s39 = scalar_select %p36, %s37, %s38
      %p42 = pneg %p36
      %p43 = scmp.eq.s32.totalorder %s15, 1
      %p44 = por %p42, %p43
      %p45 = scmp.ne.s32.totalorder %s37, %s40
      %p46 = scmp.eq.s32.totalorder %s15, 0
      %p47 = por %p45, %p46
      %p48 = scmp.ne.s32.totalorder %s37, %s40
      %p49 = scmp.eq.s32.totalorder %s20, 1
      %p50 = por %p48, %p49
      %p51 = scmp.ne.s32.totalorder %s40, %s41
      %p52 = scmp.eq.s32.totalorder %s20, 0
      %p53 = por %p51, %p52
      %p54 = scmp.ne.s32.totalorder %s40, %s41
      %p55 = scmp.eq.s32.totalorder %s21, 1
      %p56 = por %p54, %p55
      %p58 = scmp.ne.s32.totalorder %s41, %s57
      %p59 = scmp.eq.s32.totalorder %s21, 0
      %p60 = por %p58, %p59
      %s61 = ssub.s32 %s23, %s30
      %p62 = scmp.eq.s32.totalorder %s61, 0
      %s64 = sadd.s32 %s63, 1
      %s65 = scalar_select %p62, %s63, %s64
      %p68 = pneg %p62
      %p69 = scmp.eq.s32.totalorder %s15, 1
      %p70 = por %p68, %p69
      %p71 = scmp.ne.s32.totalorder %s63, %s66
      %p72 = scmp.eq.s32.totalorder %s15, 0
      %p73 = por %p71, %p72
      %p74 = scmp.ne.s32.totalorder %s63, %s66
      %p75 = scmp.eq.s32.totalorder %s20, 1
      %p76 = por %p74, %p75
      %p77 = scmp.ne.s32.totalorder %s66, %s67
      %p78 = scmp.eq.s32.totalorder %s20, 0
      %p79 = por %p77, %p78
      %p80 = scmp.ne.s32.totalorder %s66, %s67
      %p81 = scmp.eq.s32.totalorder %s21, 1
      %p82 = por %p80, %p81
      %p84 = scmp.ne.s32.totalorder %s67, %s83
      %p85 = scmp.eq.s32.totalorder %s21, 0
      %p86 = por %p84, %p85
      %s87 = sadd.s32 %s23, 1
      %s88 = sadd.s32 %s30, 1
      %s89 = ssub.s32 %s87, %s88
      %p90 = scmp.eq.s32.totalorder %s89, 0
      %s92 = sadd.s32 %s91, 1
      %s93 = scalar_select %p90, %s91, %s92
      %p96 = pneg %p90
      %p97 = scmp.eq.s32.totalorder %s15, 1
      %p98 = por %p96, %p97
      %p99 = scmp.ne.s32.totalorder %s91, %s94
      %p100 = scmp.eq.s32.totalorder %s15, 0
      %p101 = por %p99, %p100
      %p102 = scmp.ne.s32.totalorder %s91, %s94
      %p103 = scmp.eq.s32.totalorder %s20, 1
      %p104 = por %p102, %p103
      %p105 = scmp.ne.s32.totalorder %s94, %s95
      %p106 = scmp.eq.s32.totalorder %s20, 0
      %p107 = por %p105, %p106
      %p108 = scmp.ne.s32.totalorder %s94, %s95
      %p109 = scmp.eq.s32.totalorder %s21, 1
      %p110 = por %p108, %p109
      %p112 = scmp.ne.s32.totalorder %s95, %s111
      %p113 = scmp.eq.s32.totalorder %s21, 0
      %p114 = por %p112, %p113
      %s115 = sadd.s32 %s23, 2
      %s116 = sadd.s32 %s30, 2
      %s117 = ssub.s32 %s115, %s116
      %p118 = scmp.eq.s32.totalorder %s117, 0
      %s120 = sadd.s32 %s119, 1
      %s121 = scalar_select %p118, %s119, %s120
      %p124 = pneg %p118
      %p125 = scmp.eq.s32.totalorder %s15, 1
      %p126 = por %p124, %p125
      %p127 = scmp.ne.s32.totalorder %s119, %s122
      %p128 = scmp.eq.s32.totalorder %s15, 0
      %p129 = por %p127, %p128
      %p130 = scmp.ne.s32.totalorder %s119, %s122
      %p131 = scmp.eq.s32.totalorder %s20, 1
      %p132 = por %p130, %p131
      %p133 = scmp.ne.s32.totalorder %s122, %s123
      %p134 = scmp.eq.s32.totalorder %s20, 0
      %p135 = por %p133, %p134
      %p136 = scmp.ne.s32.totalorder %s122, %s123
      %p137 = scmp.eq.s32.totalorder %s21, 1
      %p138 = por %p136, %p137
      %p140 = scmp.ne.s32.totalorder %s123, %s139
      %p141 = scmp.eq.s32.totalorder %s21, 0
      %p142 = por %p140, %p141
      %s143 = ssub.s32 %s23, %s30
      %p144 = scmp.eq.s32.totalorder %s143, 0
      %s146 = sadd.s32 %s145, 1
      %s147 = scalar_select %p144, %s145, %s146
      %p150 = pneg %p144
      %p151 = scmp.eq.s32.totalorder %s15, 1
      %p152 = por %p150, %p151
      %p153 = scmp.ne.s32.totalorder %s145, %s148
      %p154 = scmp.eq.s32.totalorder %s15, 0
      %p155 = por %p153, %p154
      %p156 = scmp.ne.s32.totalorder %s145, %s148
      %p157 = scmp.eq.s32.totalorder %s20, 1
      %p158 = por %p156, %p157
      %p159 = scmp.ne.s32.totalorder %s148, %s149
      %p160 = scmp.eq.s32.totalorder %s20, 0
      %p161 = por %p159, %p160
      %p162 = scmp.ne.s32.totalorder %s148, %s149
      %p163 = scmp.eq.s32.totalorder %s21, 1
      %p164 = por %p162, %p163
      %p166 = scmp.ne.s32.totalorder %s149, %s165
      %p167 = scmp.eq.s32.totalorder %s21, 0
      %p168 = por %p166, %p167
      %s169 = ssub.s32 %s22, %s34
      %s170 = ssub.s32 %s23, %s30
      %s171 = sor.u32 %s169, %s170
      %p172 = scmp.eq.s32.totalorder %s171, 0
      %s174 = sadd.s32 %s173, 1
      %s175 = scalar_select %p172, %s173, %s174
      %p178 = pneg %p172
      %p179 = scmp.eq.s32.totalorder %s15, 1
      %p180 = por %p178, %p179
      %p181 = scmp.ne.s32.totalorder %s173, %s176
      %p182 = scmp.eq.s32.totalorder %s15, 0
      %p183 = por %p181, %p182
      %p184 = scmp.ne.s32.totalorder %s173, %s176
      %p185 = scmp.eq.s32.totalorder %s20, 1
      %p186 = por %p184, %p185
      %p187 = scmp.ne.s32.totalorder %s176, %s177
      %p188 = scmp.eq.s32.totalorder %s20, 0
      %p189 = por %p187, %p188
      %p190 = scmp.ne.s32.totalorder %s176, %s177
      %p191 = scmp.eq.s32.totalorder %s21, 1
      %p192 = por %p190, %p191
      %p194 = scmp.ne.s32.totalorder %s177, %s193
      %p195 = scmp.eq.s32.totalorder %s21, 0
      %p196 = por %p194, %p195
      %s197 = ssub.s32 %s22, %s34
      %p198 = scmp.eq.s32.totalorder %s197, 0
      %s200 = sadd.s32 %s199, 1
      %s201 = scalar_select %p198, %s199, %s200
      %p204 = pneg %p198
      %p205 = scmp.eq.s32.totalorder %s15, 1
      %p206 = por %p204, %p205
      %p207 = scmp.ne.s32.totalorder %s199, %s202
      %p208 = scmp.eq.s32.totalorder %s15, 0
      %p209 = por %p207, %p208
      %p210 = scmp.ne.s32.totalorder %s199, %s202
      %p211 = scmp.eq.s32.totalorder %s20, 1
      %p212 = por %p210, %p211
      %p213 = scmp.ne.s32.totalorder %s202, %s203
      %p214 = scmp.eq.s32.totalorder %s20, 0
      %p215 = por %p213, %p214
      %p216 = scmp.ne.s32.totalorder %s202, %s203
      %p217 = scmp.eq.s32.totalorder %s21, 1
      %p218 = por %p216, %p217
      %p220 = scmp.ne.s32.totalorder %s203, %s219
      %p221 = scmp.eq.s32.totalorder %s21, 0
      %p222 = por %p220, %p221
      %p223 = scmp.le.s32.totalorder 1, %s15
      %p224 = scmp.lt.s32.totalorder %s15, 3
      %p225 = pnand %p223, %p224
      %p226 = pneg %p225
      // Predicated region
      $region9: #{tpu_custom_call.1} parent=5 // pred_check
        _
      $region10: #{tpu_custom_call.1} parent=5 // pred_check_branch
        %228 = sbr.rel (%p225) target = $region12
      $region11: #{tpu_custom_call.1} parent=5 // pred_region
        %s229 = ssub.s32 %s15, 1
        // Predicated region
        $region13: #{tpu_custom_call.1} parent=11 // pred_check
          %p230 = pneg %p79
        $region14: #{tpu_custom_call.1} parent=11 // pred_check_branch
          %232 = sbr.rel (%p230) target = $region16
        $region15: #{tpu_custom_call.1} parent=11 // pred_region
          %s233 = smul.u32 8, %s25
          %p234 = scmp.lt.s32.totalorder %s233, 23
          %s235 = scalar_select %p234, %s233, 23
          %s236 = smul.addr %s235, 4
          %s237 = scalar_lea.vmem %s1, %s236
          %s238 = smul.u32 8, %s25
        $region16: #{tpu_custom_call.1} parent=11 // pred_fallthru
          _
        // Predicated region
        $region17: #{tpu_custom_call.1} parent=11 // pred_check
          %p239 = pneg %p107
        $region18: #{tpu_custom_call.1} parent=11 // pred_check_branch
          %241 = sbr.rel (%p239) target = $region20
        $region19: #{tpu_custom_call.1} parent=11 // pred_region
          %s242 = sadd.s32 %s25, 1
          %s243 = smul.u32 8, %s242
          %p244 = scmp.lt.s32.totalorder %s243, 23
          %s245 = scalar_select %p244, %s243, 23
          %s246 = smul.addr %s245, 4
          %s247 = scalar_lea.vmem %s2, %s246
          %s248 = sadd.s32 %s25, 1
          %s249 = smul.u32 8, %s248
        $region20: #{tpu_custom_call.1} parent=11 // pred_fallthru
          _
        // Predicated region
        $region21: #{tpu_custom_call.1} parent=11 // pred_check
          %p250 = pneg %p135
        $region22: #{tpu_custom_call.1} parent=11 // pred_check_branch
          %252 = sbr.rel (%p250) target = $region24
        $region23: #{tpu_custom_call.1} parent=11 // pred_region
          %s253 = sadd.s32 %s25, 2
          %s254 = smul.u32 8, %s253
          %p255 = scmp.lt.s32.totalorder %s254, 23
          %s256 = scalar_select %p255, %s254, 23
          %s257 = smul.addr %s256, 4
          %s258 = scalar_lea.vmem %s3, %s257
          %s259 = sadd.s32 %s25, 2
          %s260 = smul.u32 8, %s259
        $region24: #{tpu_custom_call.1} parent=11 // pred_fallthru
          _
        // Predicated region
        $region25: #{tpu_custom_call.1} parent=11 // pred_check
          %p261 = pneg %p161
        $region26: #{tpu_custom_call.1} parent=11 // pred_check_branch
          %263 = sbr.rel (%p261) target = $region28
        $region27: #{tpu_custom_call.1} parent=11 // pred_region
          %s264 = smul.u32 8, %s25
          %p265 = scmp.lt.s32.totalorder %s264, 7
          %s266 = scalar_select %p265, %s264, 7
          %s267 = smul.addr %s266, 4
          %s268 = scalar_lea.vmem %s4, %s267
          %s269 = smul.u32 8, %s25
        $region28: #{tpu_custom_call.1} parent=11 // pred_fallthru
          _
      $region12: #{tpu_custom_call.1} parent=5 // pred_fallthru
        _
      %p270 = scmp.lt.s32.totalorder %s15, 2
      // Predicated region
      $region29: #{tpu_custom_call.1} parent=5 // pred_check
        %p271 = pneg %p270
      $region30: #{tpu_custom_call.1} parent=5 // pred_check_branch
        %273 = sbr.rel (%p271) target = $region32
      $region31: #{tpu_custom_call.1} parent=5 // pred_region
        // Predicated region
        $region33: #{tpu_custom_call.1} parent=31 // pred_check
          %p274 = pneg %p47
        $region34: #{tpu_custom_call.1} parent=31 // pred_check_branch
          %276 = sbr.rel (%p274) target = $region36
        $region35: #{tpu_custom_call.1} parent=31 // pred_region
          %p277 = scmp.lt.s32.totalorder %s22, 1
          %s278 = scalar_select %p277, %s22, 1
          %s279 = smul.addr %s278, 4
          %s280 = scalar_lea.vmem %s0, %s279
        $region36: #{tpu_custom_call.1} parent=31 // pred_fallthru
          _
        // Predicated region
        $region37: #{tpu_custom_call.1} parent=31 // pred_check
          %p281 = pneg %p183
        $region38: #{tpu_custom_call.1} parent=31 // pred_check_branch
          %283 = sbr.rel (%p281) target = $region40
        $region39: #{tpu_custom_call.1} parent=31 // pred_region
          %s284 = smul.u32 4, %s23
          %p285 = scmp.lt.s32.totalorder %s22, 1
          %s286 = scalar_select %p285, %s22, 1
          %p287 = scmp.lt.s32.totalorder %s284, 3
          %s288 = scalar_select %p287, %s284, 3
          %s289 = smul.addr %s286, 4
          %s290 = sadd.s32 %s288, %s289
          %s291 = smul.addr %s290, 8
          %s292 = scalar_lea.vmem %s5, %s291
          %s293 = smul.u32 4, %s23
        $region40: #{tpu_custom_call.1} parent=31 // pred_fallthru
          _
      $region32: #{tpu_custom_call.1} parent=5 // pred_fallthru
        _
      %p294 = scmp.le.s32.totalorder 1, %s15
      %p295 = scmp.lt.s32.totalorder %s15, 3
      %p296 = pnand %p294, %p295
      %p297 = pneg %p296
      // Predicated region
      $region41: #{tpu_custom_call.1} parent=5 // pred_check
        _
      $region42: #{tpu_custom_call.1} parent=5 // pred_check_branch
        %299 = sbr.rel (%p296) target = $region44
      $region43: #{tpu_custom_call.1} parent=5 // pred_region
        %s300 = ssub.s32 %s15, 1
        %p301 = scmp.lt.s32.totalorder %s24, 1
        %s302 = scalar_select %p301, %s24, 1
        %s303 = smul.addr %s302, 4
        %s304 = scalar_lea.vmem %s0, %s303
        %p305 = pneg %p53
        %p306 = pneg %p50
        %s307 = smul.u32 8, %s25
        %p308 = scmp.lt.s32.totalorder %s307, 23
        %s309 = scalar_select %p308, %s307, 23
        %s310 = smul.addr %s309, 4
        %s311 = scalar_lea.vmem %s1, %s310
        %p312 = pneg %p79
        %p313 = pneg %p76
        %s314 = sadd.s32 %s25, 1
        %s315 = smul.u32 8, %s314
        %p316 = scmp.lt.s32.totalorder %s315, 23
        %s317 = scalar_select %p316, %s315, 23
        %s318 = smul.addr %s317, 4
        %s319 = scalar_lea.vmem %s2, %s318
        %p320 = pneg %p107
        %p321 = pneg %p104
        %s322 = sadd.s32 %s25, 2
        %s323 = smul.u32 8, %s322
        %p324 = scmp.lt.s32.totalorder %s323, 23
        %s325 = scalar_select %p324, %s323, 23
        %s326 = smul.addr %s325, 4
        %s327 = scalar_lea.vmem %s3, %s326
        %p328 = pneg %p135
        %p329 = pneg %p132
        %s330 = smul.u32 8, %s25
        %p331 = scmp.lt.s32.totalorder %s330, 7
        %s332 = scalar_select %p331, %s330, 7
        %s333 = smul.addr %s332, 4
        %s334 = scalar_lea.vmem %s4, %s333
        %p335 = pneg %p161
        %p336 = pneg %p158
        %s337 = smul.u32 4, %s25
        %p338 = scmp.lt.s32.totalorder %s24, 1
        %s339 = scalar_select %p338, %s24, 1
        %p340 = scmp.lt.s32.totalorder %s337, 3
        %s341 = scalar_select %p340, %s337, 3
        %s342 = smul.addr %s339, 4
        %s343 = sadd.s32 %s341, %s342
        %s344 = smul.addr %s343, 8
        %s345 = scalar_lea.vmem %s5, %s344
        %p346 = pneg %p189
        %p347 = pneg %p186
        %p348 = pneg %p215
        %p349 = pneg %p212
        %s350 = sand.u32 %s202, 1
        %s351 = scalar_lea.sflag [#allocation3], %s350
        %s352 = sand.u32 %s202, 1
        %s353 = smul.addr %s352, 8
        %s354 = scalar_lea.vmem [#allocation2], %s353
        %p355 = scmp.lt.s32.totalorder %s24, 1
        %s356 = scalar_select %p355, %s24, 1
        %s357 = smul.addr %s356, 4
        %s358 = scalar_lea.vmem %s0, %s357
        %s359 = smul.u32 8, %s25
        %p360 = scmp.lt.s32.totalorder %s359, 23
        %s361 = scalar_select %p360, %s359, 23
        %s362 = smul.addr %s361, 4
        %s363 = scalar_lea.vmem %s1, %s362
        %s364 = smul.u32 8, %s25
        %s365 = sadd.s32 %s25, 1
        %s366 = smul.u32 8, %s365
        %p367 = scmp.lt.s32.totalorder %s366, 23
        %s368 = scalar_select %p367, %s366, 23
        %s369 = smul.addr %s368, 4
        %s370 = scalar_lea.vmem %s2, %s369
        %s371 = sadd.s32 %s25, 1
        %s372 = smul.u32 8, %s371
        %s373 = sadd.s32 %s25, 2
        %s374 = smul.u32 8, %s373
        %p375 = scmp.lt.s32.totalorder %s374, 23
        %s376 = scalar_select %p375, %s374, 23
        %s377 = smul.addr %s376, 4
        %s378 = scalar_lea.vmem %s3, %s377
        %s379 = sadd.s32 %s25, 2
        %s380 = smul.u32 8, %s379
        %s381 = smul.u32 8, %s25
        %p382 = scmp.lt.s32.totalorder %s381, 7
        %s383 = scalar_select %p382, %s381, 7
        %s384 = smul.addr %s383, 4
        %s385 = scalar_lea.vmem %s4, %s384
        %s386 = smul.u32 8, %s25
        %s387 = smul.u32 4, %s25
        %p388 = scmp.lt.s32.totalorder %s24, 1
        %s389 = scalar_select %p388, %s24, 1
        %p390 = scmp.lt.s32.totalorder %s387, 3
        %s391 = scalar_select %p390, %s387, 3
        %s392 = smul.addr %s389, 4
        %s393 = sadd.s32 %s391, %s392
        %s394 = smul.addr %s393, 8
        %s395 = scalar_lea.vmem %s5, %s394
        %s396 = smul.u32 4, %s25
        %v398 = vld [vmem:[%s358] sm:$0xf]
        %v399 = vld [vmem:[%s363] sm:$0xf]
        %v400 = vld [vmem:[%s363 + $0x4] sm:$0xf]
        %v401 = vld [vmem:[%s363 + $0x8] sm:$0xf]
        %v402 = vld [vmem:[%s363 + $0xc] sm:$0xf]
        %v403 = vld [vmem:[%s363 + $0x10] sm:$0xf]
        %v404 = vld [vmem:[%s363 + $0x14] sm:$0xf]
        %v405 = vld [vmem:[%s363 + $0x18] sm:$0xf]
        %v406 = vld [vmem:[%s363 + $0x1c] sm:$0xf]
        %v415 = vunpack.c.l.b16 %v399
        %v416 = vunpack.c.l.b16 %v400
        %v417 = vunpack.c.l.b16 %v401
        %v418 = vunpack.c.l.b16 %v402
        %v419 = vunpack.c.l.b16 %v403
        %v420 = vunpack.c.l.b16 %v404
        %v421 = vunpack.c.l.b16 %v405
        %v422 = vunpack.c.l.b16 %v406
        %v423 = vpack.c.b16 %v416, %v415
        %v424 = vpack.c.b16 %v418, %v417
        %v425 = vpack.c.b16 %v420, %v419
        %v426 = vpack.c.b16 %v422, %v421
        %vm427 = vcmask 261120
        %v429 = vsel %vm427, %v398, 0
        %v432 = vsel %vm427, %v423, 0
        %v435 = vsel %vm427, %v424, 0
        %v438 = vsel %vm427, %v425, 0
        %v441 = vsel %vm427, %v426, 0
        %443 = vmatpush.bf16.xpose.msra.mxu0 0
        %444 = vmatpush.bf16.xpose.msra.mxu0 0
        %445 = vmatpush.bf16.xpose.msra.mxu0 0
        %446 = vmatpush.bf16.xpose.msra.mxu0 0
        %447 = vmatpush.bf16.xpose.msra.mxu0 %v441
        %448 = vmatpush.bf16.xpose.msra.mxu0 %v438
        %449 = vmatpush.bf16.xpose.msra.mxu0 %v435
        %450 = vmatpush.bf16.xpose.msra.mxu0 %v432
        %451 = vmatmul.bf16.gmra.mxu0 %v429
        %v452 = vpop.f32.mrf.mxu0
        %v453 = vadd.f32 0.0, %v452
        %v454 = vpop.f32.mrf.mxu0
        %455 = vdwg.mxu0
        %v456 = vmul.f32 %v453, 0.25
        %v457 = vld [vmem:[%s370] sm:$0xf]
        %v458 = vld [vmem:[%s370 + $0x4] sm:$0xf]
        %v459 = vld [vmem:[%s370 + $0x8] sm:$0xf]
        %v460 = vld [vmem:[%s370 + $0xc] sm:$0xf]
        %v461 = vld [vmem:[%s370 + $0x10] sm:$0xf]
        %v462 = vld [vmem:[%s370 + $0x14] sm:$0xf]
        %v463 = vld [vmem:[%s370 + $0x18] sm:$0xf]
        %v464 = vld [vmem:[%s370 + $0x1c] sm:$0xf]
        %v473 = vunpack.c.l.b16 %v457
        %v474 = vunpack.c.l.b16 %v458
        %v475 = vunpack.c.l.b16 %v459
        %v476 = vunpack.c.l.b16 %v460
        %v477 = vunpack.c.l.b16 %v461
        %v478 = vunpack.c.l.b16 %v462
        %v479 = vunpack.c.l.b16 %v463
        %v480 = vunpack.c.l.b16 %v464
        %v481 = vpack.c.b16 %v474, %v473
        %v482 = vpack.c.b16 %v476, %v475
        %v483 = vpack.c.b16 %v478, %v477
        %v484 = vpack.c.b16 %v480, %v479
        %v486 = vsel %vm427, %v481, 0
        %v489 = vsel %vm427, %v482, 0
        %v492 = vsel %vm427, %v483, 0
        %v495 = vsel %vm427, %v484, 0
        %497 = vmatpush.bf16.xpose.msra.mxu0 0
        %498 = vmatpush.bf16.xpose.msra.mxu0 0
        %499 = vmatpush.bf16.xpose.msra.mxu0 0
        %500 = vmatpush.bf16.xpose.msra.mxu0 0
        %501 = vmatpush.bf16.xpose.msra.mxu0 %v495
        %502 = vmatpush.bf16.xpose.msra.mxu0 %v492
        %503 = vmatpush.bf16.xpose.msra.mxu0 %v489
        %504 = vmatpush.bf16.xpose.msra.mxu0 %v486
        %505 = vmatmul.bf16.gmra.mxu0 %v429
        %v506 = vpop.f32.mrf.mxu0
        %v507 = vadd.f32 0.0, %v506
        %v508 = vpop.f32.mrf.mxu0
        %509 = vdwg.mxu0
        %v510 = vld [vmem:[%s378] sm:$0xf]
        %v511 = vld [vmem:[%s378 + $0x4] sm:$0xf]
        %v512 = vld [vmem:[%s378 + $0x8] sm:$0xf]
        %v513 = vld [vmem:[%s378 + $0xc] sm:$0xf]
        %v514 = vld [vmem:[%s378 + $0x10] sm:$0xf]
        %v515 = vld [vmem:[%s378 + $0x14] sm:$0xf]
        %v516 = vld [vmem:[%s378 + $0x18] sm:$0xf]
        %v517 = vld [vmem:[%s378 + $0x1c] sm:$0xf]
        %v526 = vunpack.c.l.b16 %v510
        %v527 = vunpack.c.l.b16 %v511
        %v528 = vunpack.c.l.b16 %v512
        %v529 = vunpack.c.l.b16 %v513
        %v530 = vunpack.c.l.b16 %v514
        %v531 = vunpack.c.l.b16 %v515
        %v532 = vunpack.c.l.b16 %v516
        %v533 = vunpack.c.l.b16 %v517
        %v534 = vpack.c.b16 %v527, %v526
        %v535 = vpack.c.b16 %v529, %v528
        %v536 = vpack.c.b16 %v531, %v530
        %v537 = vpack.c.b16 %v533, %v532
        %v539 = vsel %vm427, %v534, 0
        %v542 = vsel %vm427, %v535, 0
        %v545 = vsel %vm427, %v536, 0
        %v548 = vsel %vm427, %v537, 0
        %550 = vmatpush.bf16.xpose.msra.mxu0 0
        %551 = vmatpush.bf16.xpose.msra.mxu0 0
        %552 = vmatpush.bf16.xpose.msra.mxu0 0
        %553 = vmatpush.bf16.xpose.msra.mxu0 0
        %554 = vmatpush.bf16.xpose.msra.mxu0 %v548
        %555 = vmatpush.bf16.xpose.msra.mxu0 %v545
        %556 = vmatpush.bf16.xpose.msra.mxu0 %v542
        %557 = vmatpush.bf16.xpose.msra.mxu0 %v539
        %558 = vmatmul.bf16.gmra.mxu0 %v429
        %v559 = vpop.f32.mrf.mxu0
        %v560 = vadd.f32 0.0, %v559
        %v561 = vpop.f32.mrf.mxu0
        %562 = vdwg.mxu0
        %v563 = vpack.c.bf16 %v456, %v456
        %v564 = vpack.c.bf16 %v507, %v507
        %v565 = vpack.c.bf16 %v560, %v560
        %vm566 = vcmask 130048
        %v568 = vsel %vm566, %v563, 0
        %v571 = vsel %vm566, %v564, 0
        %573 = vmatpush.bf16.xpose.msra.mxu0 0
        %574 = vmatpush.bf16.xpose.msra.mxu0 0
        %575 = vmatpush.bf16.xpose.msra.mxu0 0
        %576 = vmatpush.bf16.xpose.msra.mxu0 0
        %577 = vmatpush.bf16.xpose.msra.mxu0 0
        %578 = vmatpush.bf16.xpose.msra.mxu0 0
        %579 = vmatpush.bf16.xpose.msra.mxu0 0
        %580 = vmatpush.bf16.xpose.msra.mxu0 %v571
        %581 = vmatmul.bf16.gmra.mxu0 %v568
        %v582 = vpop.f32.mrf.mxu0
        %v583 = vadd.f32 0.0, %v582
        %v584 = vpop.f32.mrf.mxu0
        %585 = vdwg.mxu0
        %vm586 = vcmask 64512
        %v587 = vsel %vm586, %v583, -inf
        %588 = vmax.xlane.f32.xlu0 %v587
        %v589 = vpop.xlane.xlu0 %588
        %v590 = vsub.f32 %v583, %v589
        %v591 = vmul.f32 %v590, 1.442695
        %v592 = vpow.pop %v591
        %v593 = vsel %vm586, %v592, 0.0
        %594 = vadd.xlane.f32.xlu0 %v593
        %v595 = vpop.xlane.xlu0 %594
        %v596 = vrcp.pop %v595
        %v597 = vmul.f32 %v592, %v596
        %v598 = vld [vmem:[%s395] sm:$0xff]
        %v599 = vmul.f32 %v598, %v597
        %v600 = vpack.c.bf16 %v599, %v599
        %v602 = vsel %vm586, %v600, 0
        %vm604 = vcmask 1043456
        %v606 = vsel %vm604, %v565, 0
        %608 = vmatpush.bf16.msra.mxu0 0
        %609 = vmatpush.bf16.msra.mxu0 0
        %610 = vmatpush.bf16.msra.mxu0 0
        %611 = vmatpush.bf16.msra.mxu0 0
        %612 = vmatpush.bf16.msra.mxu0 0
        %613 = vmatpush.bf16.msra.mxu0 0
        %614 = vmatpush.bf16.msra.mxu0 0
        %615 = vmatpush.bf16.msra.mxu0 %v606
        %616 = vmatmul.bf16.gmra.mxu0 %v602
        %v617 = vpop.f32.mrf.mxu0
        %v618 = vadd.f32 0.0, %v617
        %v619 = vpop.f32.mrf.mxu0
        %620 = vdwg.mxu0
        %622 = vrot.lane.b32.xlu0 %v563, 112
        %v623 = vpop.permute.xlu0 %622
        %625 = vrot.lane.b32.xlu0 %v564, 112
        %v626 = vpop.permute.xlu0 %625
        %v628 = vsel %vm566, %v623, 0
        %v631 = vsel %vm566, %v626, 0
        %633 = vmatpush.bf16.xpose.msra.mxu0 0
        %634 = vmatpush.bf16.xpose.msra.mxu0 0
        %635 = vmatpush.bf16.xpose.msra.mxu0 0
        %636 = vmatpush.bf16.xpose.msra.mxu0 0
        %637 = vmatpush.bf16.xpose.msra.mxu0 0
        %638 = vmatpush.bf16.xpose.msra.mxu0 0
        %639 = vmatpush.bf16.xpose.msra.mxu0 0
        %640 = vmatpush.bf16.xpose.msra.mxu0 %v631
        %641 = vmatmul.bf16.gmra.mxu0 %v628
        %v642 = vpop.f32.mrf.mxu0
        %v643 = vadd.f32 0.0, %v642
        %v644 = vpop.f32.mrf.mxu0
        %645 = vdwg.mxu0
        %v646 = vsel %vm586, %v643, -inf
        %647 = vmax.xlane.f32.xlu0 %v646
        %v648 = vpop.xlane.xlu0 %647
        %v649 = vsub.f32 %v643, %v648
        %v650 = vmul.f32 %v649, 1.442695
        %v651 = vpow.pop %v650
        %v652 = vsel %vm586, %v651, 0.0
        %653 = vadd.xlane.f32.xlu0 %v652
        %v654 = vpop.xlane.xlu0 %653
        %v655 = vrcp.pop %v654
        %v656 = vmul.f32 %v651, %v655
        %s657 = scalar_lea.vmem %s395, 8
        %v658 = vld [vmem:[%s657] sm:$0xff]
        %v659 = vmul.f32 %v658, %v656
        %v660 = vpack.c.bf16 %v659, %v659
        %662 = vrot.lane.b32.xlu0 %v565, 112
        %v663 = vpop.permute.xlu0 %662
        %v665 = vsel %vm586, %v660, 0
        %v668 = vsel %vm604, %v663, 0
        %670 = vmatpush.bf16.msra.mxu0 0
        %671 = vmatpush.bf16.msra.mxu0 0
        %672 = vmatpush.bf16.msra.mxu0 0
        %673 = vmatpush.bf16.msra.mxu0 0
        %674 = vmatpush.bf16.msra.mxu0 0
        %675 = vmatpush.bf16.msra.mxu0 0
        %676 = vmatpush.bf16.msra.mxu0 0
        %677 = vmatpush.bf16.msra.mxu0 %v668
        %678 = vmatmul.bf16.gmra.mxu0 %v665
        %v679 = vpop.f32.mrf.mxu0
        %v680 = vadd.f32 0.0, %v679
        %v681 = vpop.f32.mrf.mxu0
        %682 = vdwg.mxu0
        %683 = vrot.lane.b32.xlu0 %v563, 96
        %v684 = vpop.permute.xlu0 %683
        %685 = vrot.lane.b32.xlu0 %v564, 96
        %v686 = vpop.permute.xlu0 %685
        %v688 = vsel %vm566, %v684, 0
        %v691 = vsel %vm566, %v686, 0
        %693 = vmatpush.bf16.xpose.msra.mxu0 0
        %694 = vmatpush.bf16.xpose.msra.mxu0 0
        %695 = vmatpush.bf16.xpose.msra.mxu0 0
        %696 = vmatpush.bf16.xpose.msra.mxu0 0
        %697 = vmatpush.bf16.xpose.msra.mxu0 0
        %698 = vmatpush.bf16.xpose.msra.mxu0 0
        %699 = vmatpush.bf16.xpose.msra.mxu0 0
        %700 = vmatpush.bf16.xpose.msra.mxu0 %v691
        %701 = vmatmul.bf16.gmra.mxu0 %v688
        %v702 = vpop.f32.mrf.mxu0
        %v703 = vadd.f32 0.0, %v702
        %v704 = vpop.f32.mrf.mxu0
        %705 = vdwg.mxu0
        %v706 = vsel %vm586, %v703, -inf
        %707 = vmax.xlane.f32.xlu0 %v706
        %v708 = vpop.xlane.xlu0 %707
        %v709 = vsub.f32 %v703, %v708
        %v710 = vmul.f32 %v709, 1.442695
        %v711 = vpow.pop %v710
        %v712 = vsel %vm586, %v711, 0.0
        %713 = vadd.xlane.f32.xlu0 %v712
        %v714 = vpop.xlane.xlu0 %713
        %v715 = vrcp.pop %v714
        %v716 = vmul.f32 %v711, %v715
        %s717 = scalar_lea.vmem %s395, 16
        %v718 = vld [vmem:[%s717] sm:$0xff]
        %v719 = vmul.f32 %v718, %v716
        %v720 = vpack.c.bf16 %v719, %v719
        %721 = vrot.lane.b32.xlu0 %v565, 96
        %v722 = vpop.permute.xlu0 %721
        %v724 = vsel %vm586, %v720, 0
        %v727 = vsel %vm604, %v722, 0
        %729 = vmatpush.bf16.msra.mxu0 0
        %730 = vmatpush.bf16.msra.mxu0 0
        %731 = vmatpush.bf16.msra.mxu0 0
        %732 = vmatpush.bf16.msra.mxu0 0
        %733 = vmatpush.bf16.msra.mxu0 0
        %734 = vmatpush.bf16.msra.mxu0 0
        %735 = vmatpush.bf16.msra.mxu0 0
        %736 = vmatpush.bf16.msra.mxu0 %v727
        %737 = vmatmul.bf16.gmra.mxu0 %v724
        %v738 = vpop.f32.mrf.mxu0
        %v739 = vadd.f32 0.0, %v738
        %v740 = vpop.f32.mrf.mxu0
        %741 = vdwg.mxu0
        %742 = vrot.lane.b32.xlu0 %v563, 80
        %v743 = vpop.permute.xlu0 %742
        %744 = vrot.lane.b32.xlu0 %v564, 80
        %v745 = vpop.permute.xlu0 %744
        %v747 = vsel %vm566, %v743, 0
        %v750 = vsel %vm566, %v745, 0
        %752 = vmatpush.bf16.xpose.msra.mxu0 0
        %753 = vmatpush.bf16.xpose.msra.mxu0 0
        %754 = vmatpush.bf16.xpose.msra.mxu0 0
        %755 = vmatpush.bf16.xpose.msra.mxu0 0
        %756 = vmatpush.bf16.xpose.msra.mxu0 0
        %757 = vmatpush.bf16.xpose.msra.mxu0 0
        %758 = vmatpush.bf16.xpose.msra.mxu0 0
        %759 = vmatpush.bf16.xpose.msra.mxu0 %v750
        %760 = vmatmul.bf16.gmra.mxu0 %v747
        %v761 = vpop.f32.mrf.mxu0
        %v762 = vadd.f32 0.0, %v761
        %v763 = vpop.f32.mrf.mxu0
        %764 = vdwg.mxu0
        %v765 = vsel %vm586, %v762, -inf
        %766 = vmax.xlane.f32.xlu0 %v765
        %v767 = vpop.xlane.xlu0 %766
        %v768 = vsub.f32 %v762, %v767
        %v769 = vmul.f32 %v768, 1.442695
        %v770 = vpow.pop %v769
        %v771 = vsel %vm586, %v770, 0.0
        %772 = vadd.xlane.f32.xlu0 %v771
        %v773 = vpop.xlane.xlu0 %772
        %v774 = vrcp.pop %v773
        %v775 = vmul.f32 %v770, %v774
        %s776 = scalar_lea.vmem %s395, 24
        %v777 = vld [vmem:[%s776] sm:$0xff]
        %v778 = vmul.f32 %v777, %v775
        %v779 = vpack.c.bf16 %v778, %v778
        %780 = vrot.lane.b32.xlu0 %v565, 80
        %v781 = vpop.permute.xlu0 %780
        %v783 = vsel %vm586, %v779, 0
        %v786 = vsel %vm604, %v781, 0
        %788 = vmatpush.bf16.msra.mxu0 0
        %789 = vmatpush.bf16.msra.mxu0 0
        %790 = vmatpush.bf16.msra.mxu0 0
        %791 = vmatpush.bf16.msra.mxu0 0
        %792 = vmatpush.bf16.msra.mxu0 0
        %793 = vmatpush.bf16.msra.mxu0 0
        %794 = vmatpush.bf16.msra.mxu0 0
        %795 = vmatpush.bf16.msra.mxu0 %v786
        %796 = vmatmul.bf16.gmra.mxu0 %v783
        %v797 = vpop.f32.mrf.mxu0
        %v798 = vadd.f32 0.0, %v797
        %v799 = vpop.f32.mrf.mxu0
        %800 = vdwg.mxu0
        %802 = vrot.lane.b32.xlu0 %v680, 16
        %v803 = vpop.permute.xlu0 %802
        %806 = vrot.lane.b32.xlu0 %v739, 32
        %v807 = vpop.permute.xlu0 %806
        %810 = vrot.lane.b32.xlu0 %v798, 48
        %v811 = vpop.permute.xlu0 %810
        %v813 = vsel %vm566, %v618, %v803
        %v814 = vsel %vm427, %v813, %v807
        %vm815 = vcmask 392192
        %v816 = vsel %vm815, %v814, %v811
        %v817 = vpack.c.bf16 %v816, %v816
        %v818 = vld [vmem:[%s385] sm:$0xf]
        %v819 = vld [vmem:[%s385 + $0x4] sm:$0xf]
        %v820 = vld [vmem:[%s385 + $0x8] sm:$0xf]
        %v821 = vld [vmem:[%s385 + $0xc] sm:$0xf]
        %v822 = vld [vmem:[%s385 + $0x10] sm:$0xf]
        %v823 = vld [vmem:[%s385 + $0x14] sm:$0xf]
        %v824 = vld [vmem:[%s385 + $0x18] sm:$0xf]
        %v825 = vld [vmem:[%s385 + $0x1c] sm:$0xf]
        %v834 = vunpack.c.l.b16 %v818
        %v835 = vunpack.c.l.b16 %v819
        %v836 = vunpack.c.l.b16 %v820
        %v837 = vunpack.c.l.b16 %v821
        %v838 = vunpack.c.l.b16 %v822
        %v839 = vunpack.c.l.b16 %v823
        %v840 = vunpack.c.l.b16 %v824
        %v841 = vunpack.c.l.b16 %v825
        %v842 = vpack.c.b16 %v835, %v834
        %v843 = vpack.c.b16 %v837, %v836
        %v844 = vpack.c.b16 %v839, %v838
        %v845 = vpack.c.b16 %v841, %v840
        %vm850 = vcmask 523264
        %v852 = vsel %vm850, %v817, 0
        %854 = vmatpush.bf16.msra.mxu0 0
        %855 = vmatpush.bf16.msra.mxu0 0
        %856 = vmatpush.bf16.msra.mxu0 0
        %857 = vmatpush.bf16.msra.mxu0 0
        %858 = vmatpush.bf16.msra.mxu0 %v845
        %859 = vmatpush.bf16.msra.mxu0 %v844
        %860 = vmatpush.bf16.msra.mxu0 %v843
        %861 = vmatpush.bf16.msra.mxu0 %v842
        %862 = vmatmul.bf16.gmra.mxu0 %v852
        %v863 = vpop.f32.mrf.mxu0
        %v864 = vadd.f32 0.0, %v863
        %v865 = vpop.f32.mrf.mxu0
        %866 = vdwg.mxu0
        %867 = vst.msk [vmem:[%s354] sm:$0xff] %vm427, %v864
        %s868 = sand.u32 %s202, 1
        %s869 = scalar_lea.sflag [#allocation3], %s868
        %s870 = sand.u32 %s202, 1
        %s871 = smul.addr %s870, 8
        %s872 = scalar_lea.vmem [#allocation2], %s871
        // Predicated region
        $region45: #{tpu_custom_call.1} parent=43 // pred_check
          %p873 = pneg %p212
        $region46: #{tpu_custom_call.1} parent=43 // pred_check_branch
          %875 = sbr.rel (%p873) target = $region48
        $region47: #{tpu_custom_call.1} parent=43 // pred_region
          %877 = vsyncadd %s869, 0
          %s878 = smul.addr %s24, 8
          %s879 = scalar_lea.hbm %s6, %s878
          %s881 = sshll.u32 %s872, 4
          %s882 = int_to_ptr.vmem [resolvable:$true] %s881
          %s883 = sshll.u32 %s879, 4
          %s884 = int_to_ptr.hbm [resolvable:$true] %s883
          %886 = dma.vmem_to_hbm [thread:$0]  %s882, 128, %s884, %s869
        $region48: #{tpu_custom_call.1} parent=43 // pred_fallthru
          _
      $region44: #{tpu_custom_call.1} parent=5 // pred_fallthru
        _
      %p887 = scmp.le.s32.totalorder 2, %s15
      // Predicated region
      $region49: #{tpu_custom_call.1} parent=5 // pred_check
        %p888 = pneg %p887
      $region50: #{tpu_custom_call.1} parent=5 // pred_check_branch
        %890 = sbr.rel (%p888) target = $region52
      $region51: #{tpu_custom_call.1} parent=5 // pred_region
        %s891 = ssub.s32 %s15, 2
        // Predicated region
        $region53: #{tpu_custom_call.1} parent=51 // pred_check
          %p892 = pneg %p218
        $region54: #{tpu_custom_call.1} parent=51 // pred_check_branch
          %894 = sbr.rel (%p892) target = $region56
        $region55: #{tpu_custom_call.1} parent=51 // pred_region
          %s895 = sand.u32 %s203, 1
          %s896 = scalar_lea.sflag [#allocation3], %s895
          %s897 = sand.u32 %s203, 1
          %s898 = smul.addr %s897, 8
          %s899 = scalar_lea.vmem [#allocation2], %s898
          %901 = dma.done %s896, 128
        $region56: #{tpu_custom_call.1} parent=51 // pred_fallthru
          _
      $region52: #{tpu_custom_call.1} parent=5 // pred_fallthru
        _
    $region6: #{tpu_custom_call.1} parent=1 // loop_footer
      %s19 = sadd.s32 1, %s15
    $region7: #{tpu_custom_call.1} parent=1 // loop_footer_branch
      %14 = sbr.rel target = $region3
    $region8: #{tpu_custom_call.1} parent=1 // loop_exit
      _
    %902 = vsyncpa [#allocation3], 1
    %s903 = scalar_lea.sflag [#allocation3], 1
    %904 = vsyncpa %s903, 1

</llo_original>
